<compile_context>
chip_gen: v7x
topology: tpu7x:2x2x1
jax: 0.10.0
libtpu: 0.0.40
codegen_flags: <defaults>
</compile_context>

<pallas_src>
import functools

import jax
import jax.numpy as jnp
from jax import lax
from jax.experimental import pallas as pl
from jax.experimental.pallas import tpu as pltpu


_NEG = -1e30  # finite "minus infinity" so 0 * _NEG == 0 (no NaN)


def _round_up(v, m):
    return ((v + m - 1) // m) * m


def _pad_feature_splits(arr, n_splits, step, step_pad):
    """(R, F) -> (R, n_splits*step_pad); split i's real columns sit at
    [i*step_pad, i*step_pad + width_i), padded columns are zero (contribute
    nothing to the dot products)."""
    r, f = arr.shape
    if step == step_pad and f == n_splits * step:
        return arr
    arr = jnp.pad(arr, ((0, 0), (0, n_splits * step - f)))
    arr = arr.reshape(r, n_splits, step)
    arr = jnp.pad(arr, ((0, 0), (0, 0), (0, step_pad - step)))
    return arr.reshape(r, n_splits * step_pad)


# -----------------------------------------------------------------------------
# Fused kernel: per-split matmul + (optional) smooth-label accumulation +
# final log_softmax / loss.  grid = (n_splits,), split axis is a reduction.
# -----------------------------------------------------------------------------
def _invnet_kernel(tgt_ref, x_ref, e_ref, loss_ref, acc_ref, *scratch,
                   inv_beta, knn, n_splits, c_real, b_real, smooth):
    onehot_ref = scratch[0] if smooth else None

    i = pl.program_id(0)
    last = pl.num_programs(0) - 1

    # Unscaled partial similarity for this feature split: (B_pad, C_pad), f32 acc.
    s = lax.dot_general(x_ref[...], e_ref[...], (((1,), (1,)), ((), ())),
                        preferred_element_type=jnp.float32)

    b_pad, c_pad = acc_ref.shape
    col = lax.broadcasted_iota(jnp.int32, (b_pad, c_pad), 1)
    col_valid = col < c_real

    @pl.when(i == 0)
    def _():
        acc_ref[...] = jnp.zeros_like(acc_ref)
        if smooth:
            onehot_ref[...] = jnp.zeros_like(onehot_ref)

    acc_ref[...] += s

    if smooth:
        # Iterative top-k on the unscaled split product (scale is monotone).
        # Padded class columns are masked so they can never be selected.
        running = jnp.where(col_valid, s, _NEG)
        topk = jnp.zeros_like(s)
        for _ in range(knn):
            mx = jnp.max(running, axis=1, keepdims=True)   # one XLU reduce / step
            sel = running == mx                            # ties multi-select; fine
            topk = jnp.where(sel, 1.0, topk)               # for continuous inputs
            running = jnp.where(sel, _NEG, running)
        onehot_ref[...] += topk * (1.0 / knn)

    @pl.when(i == last)
    def _():
        tgt = tgt_ref[...]                                 # (B_pad, 1) int32
        tgt_mask = col == tgt
        sim = jnp.where(col_valid, acc_ref[...] * inv_beta, _NEG)
        m = jnp.max(sim, axis=1, keepdims=True)
        z = sim - m
        logp = z - jnp.log(jnp.sum(jnp.exp(z), axis=1, keepdims=True))

        if smooth:
            # scatter_(target, 1.0) per split  ->  n_splits at the target col.
            onehot = jnp.where(tgt_mask, float(n_splits), onehot_ref[...])
            onehot = jnp.where(col_valid, onehot, 0.0)
            per_row = jnp.sum(-onehot * logp, axis=1, keepdims=True)
            denom = float(b_real * n_splits)
        else:
            per_row = jnp.sum(-jnp.where(tgt_mask, logp, 0.0), axis=1,
                              keepdims=True)
            denom = float(b_real)

        row = lax.broadcasted_iota(jnp.int32, (b_pad, 1), 0)
        per_row = jnp.where(row < b_real, per_row, 0.0)    # drop padded rows
        loss_ref[...] = jnp.sum(per_row, axis=0, keepdims=True) * (1.0 / denom)


# -----------------------------------------------------------------------------
# Wrapper
# -----------------------------------------------------------------------------
class InvNetPallas:
    def __init__(self, num_features, num_classes, beta=0.05, knn=6, alpha=0.01,
                 n_splits=10, key=None, compute_dtype=jnp.float32,
                 vmem_limit_bytes=None):
        self.num_features = num_features
        self.num_classes = num_classes
        self.beta = beta
        self.knn = knn
        self.alpha = alpha
        self.n_splits = n_splits
        self.compute_dtype = compute_dtype
        self.vmem_limit_bytes = vmem_limit_bytes
        assert knn <= num_classes

        # Same split rule as the PyTorch module.
        step = num_features // n_splits
        if step * n_splits < num_features:
            step += 1
        self.step = step
        # Lane-align the per-split feature chunk (>=128; a multiple of 256 is
        # slightly better for the bf16 MXU on v6e/v7x).
        self.step_pad = _round_up(step, 128)
        self.c_pad = _round_up(num_classes, 128)

        # nn.Parameter(torch.zeros(C, F)) in the original; deterministic
        # row-normalized init so compute is non-trivial.
        if key is None:
            key = jax.random.PRNGKey(0)
        em = jax.random.normal(key, (num_classes, num_features), jnp.float32)
        self.em = em / jnp.linalg.norm(em, axis=1, keepdims=True)

        # Pad em ONCE (fixed parameter): classes -> c_pad rows, feature axis
        # laid out so split i occupies a step_pad-wide, 128-aligned block.
        em_p = jnp.pad(self.em, ((0, self.c_pad - num_classes), (0, 0)))
        em_p = _pad_feature_splits(em_p, n_splits, step, self.step_pad)
        self.em_padded = em_p.astype(compute_dtype)

    def __call__(self, inputs, targets, epoch):
        B, F = inputs.shape
        assert F == self.num_features
        C = self.num_classes
        n = self.n_splits
        B_pad = _round_up(B, 8)

        # Small per-call padding of the (B, F) input only (no em transpose/copy).
        x = _pad_feature_splits(inputs.astype(jnp.float32), n, self.step,
                                self.step_pad)
        x = jnp.pad(x, ((0, B_pad - B), (0, 0))).astype(self.compute_dtype)
        tgt = jnp.pad(targets.astype(jnp.int32), (0, B_pad - B)).reshape(B_pad, 1)

        smooth = (self.knn > 0) and (epoch > 4)   # static Python branch

        kernel = functools.partial(
            _invnet_kernel, inv_beta=1.0 / self.beta, knn=self.knn,
            n_splits=n, c_real=C, b_real=B, smooth=smooth)

        scratch = [pltpu.VMEM((B_pad, self.c_pad), jnp.float32)]   # sim acc
        if smooth:
            scratch.append(pltpu.VMEM((B_pad, self.c_pad), jnp.float32))  # onehot

        loss = pl.pallas_call(
            kernel,
            out_shape=jax.ShapeDtypeStruct((1, 1), jnp.float32),
            grid_spec=pltpu.PrefetchScalarGridSpec(
                num_scalar_prefetch=0,
                grid=(n,),
                in_specs=[
                    pl.BlockSpec((B_pad, 1), lambda i: (0, 0)),
                    pl.BlockSpec((B_pad, self.step_pad), lambda i: (0, i)),
                    pl.BlockSpec((self.c_pad, self.step_pad), lambda i: (0, i)),
                ],
                out_specs=pl.BlockSpec((1, 1), lambda i: (0, 0)),
                scratch_shapes=scratch),
            compiler_params=pltpu.CompilerParams(
                dimension_semantics=("arbitrary",),
                vmem_limit_bytes=self.vmem_limit_bytes),
        )(tgt, x, self.em_padded)
        return loss[0, 0]


# -----------------------------------------------------------------------------
# Pure-JAX reference (mirrors the PyTorch forward exactly)
# -----------------------------------------------------------------------------
def _ref_forward(inputs, targets, em, epoch, beta, knn, n_splits):
    B = inputs.shape[0]
    feats = em.shape[1]
    sim = inputs @ em.T
    step = feats // n_splits
    if step * n_splits < feats:
        step += 1
    sims = []
    for i in range(n_splits):
        l, r = step * i, min(step * (i + 1), feats)
        sims.append(inputs[:, l:r] @ em[:, l:r].T)
    sims = jnp.stack(sims)
    sim = sim / beta
    sims = sims / beta
    logp = jax.nn.log_softmax(sim, axis=1)
    if knn > 0 and epoch > 4:
        loss = 0.0
        rows = jnp.arange(B)
        for i in range(n_splits):
            _, idx = jax.lax.top_k(sims[i], knn)
            onehot = jnp.zeros_like(sims[i])
            onehot = onehot.at[rows[:, None], idx].set(1.0 / knn)
            onehot = onehot.at[rows, targets].set(1.0)
            loss = loss + jnp.mean(jnp.sum(-onehot * logp, axis=1))
        return loss / n_splits
    else:
        return jnp.mean(-logp[jnp.arange(B), targets])


if __name__ == "__main__":
    key = jax.random.PRNGKey(0)
    k_em, k_x, k_t = jax.random.split(key, 3)

    B, F, C = 8, 32, 16
    n_splits, knn, beta = 4, 6, 0.05

    net = InvNetPallas(F, C, beta=beta, knn=knn, alpha=0.01,
                       n_splits=n_splits, key=k_em)

    inputs = jax.random.normal(k_x, (B, F), jnp.float32)
    inputs = inputs / jnp.linalg.norm(inputs, axis=1, keepdims=True)
    targets = jax.random.randint(k_t, (B,), 0, C, jnp.int32)

    loss_smooth = net(inputs, targets, epoch=6)   # knn > 0 and epoch > 4
    loss_ce = net(inputs, targets, epoch=2)       # cross-entropy branch
    jax.block_until_ready((loss_smooth, loss_ce))

    ref_s = _ref_forward(inputs, targets, net.em, 6, beta, knn, n_splits)
    ref_c = _ref_forward(inputs, targets, net.em, 2, beta, knn, n_splits)
    assert jnp.allclose(loss_smooth, ref_s, atol=1e-4, rtol=1e-4), (loss_smooth, ref_s)
    assert jnp.allclose(loss_ce, ref_c, atol=1e-4, rtol=1e-4), (loss_ce, ref_c)

    # bf16 fast path (halves the em HBM stream, feeds the bf16 MXU); f32 accum.
    net_bf16 = InvNetPallas(F, C, beta=beta, knn=knn, alpha=0.01,
                            n_splits=n_splits, key=k_em,
                            compute_dtype=jnp.bfloat16)
    loss_bf16 = net_bf16(inputs, targets, epoch=6)
    jax.block_until_ready(loss_bf16)
    assert bool(jnp.isfinite(loss_bf16)), loss_bf16

    print("KERNEL_OK")
</pallas_src>

<mosaic_0001>
module attributes {stable_mosaic.version = 11 : i64} {
  func.func @_invnet_kernel(%arg0: i32, %arg1: memref<8x1xi32, #tpu.memory_space<vmem>>, %arg2: memref<8x128xf32, #tpu.memory_space<vmem>>, %arg3: memref<128x128xf32, #tpu.memory_space<vmem>>, %arg4: memref<1x1xf32, #tpu.memory_space<vmem>>, %arg5: memref<8x128xf32, #tpu.memory_space<vmem>>, %arg6: memref<8x128xf32, #tpu.memory_space<vmem>>) attributes {dimension_semantics = [#tpu.dimension_semantics<arbitrary>], iteration_bounds = array<i64: 4>, scalar_prefetch = 0 : i64, scratch_operands = 2 : i64, tpu.core_type = #tpu.core_type<tc>, window_params = [{pipeline_mode = #tpu.pipeline_mode<synchronous>, transform_indices = @transform_0, window_bounds = array<i64: 8, 1>}, {transform_indices = @transform_1, window_bounds = array<i64: 8, 128>}, {transform_indices = @transform_2, window_bounds = array<i64: 128, 128>}, {pipeline_mode = #tpu.pipeline_mode<synchronous>, transform_indices = @transform_3, window_bounds = array<i64: 1, 1>}]} {
    %c0 = arith.constant 0 : index
    %c0_0 = arith.constant 0 : index
    %0 = vector.load %arg2[%c0, %c0_0] : memref<8x128xf32, #tpu.memory_space<vmem>>, vector<8x128xf32>
    %c0_1 = arith.constant 0 : index
    %c0_2 = arith.constant 0 : index
    %1 = vector.load %arg3[%c0_1, %c0_2] : memref<128x128xf32, #tpu.memory_space<vmem>>, vector<128x128xf32>
    %cst = arith.constant dense<0.000000e+00> : vector<8x128xf32>
    %2 = tpu.matmul %0, %1, %cst {dimension_numbers = #tpu.dot_dimension_numbers<[1], [1], [0], [0], [0, 0, 1, 0], [], []>} : vector<8x128xf32>, vector<128x128xf32>, vector<8x128xf32> -> vector<8x128xf32>
    %3 = tpu.iota {dimensions = array<i32: 1>} : vector<8x128xi32>
    %c16_i32 = arith.constant 16 : i32
    %4 = vector.broadcast %c16_i32 : i32 to vector<8x128xi32>
    %5 = arith.cmpi slt, %3, %4 : vector<8x128xi32>
    %c0_i32 = arith.constant 0 : i32
    %6 = arith.cmpi eq, %arg0, %c0_i32 : i32
    %7 = arith.extui %6 : i1 to i32
    %c0_i32_3 = arith.constant 0 : i32
    %8 = arith.cmpi ne, %7, %c0_i32_3 : i32
    scf.if %8 {
      %cst_33 = arith.constant 0.000000e+00 : f32
      %69 = vector.broadcast %cst_33 : f32 to vector<8x128xf32>
      %c0_34 = arith.constant 0 : index
      %c0_35 = arith.constant 0 : index
      %70 = vector.load %arg5[%c0_34, %c0_35] : memref<8x128xf32, #tpu.memory_space<vmem>>, vector<8x128xf32>
      tpu.vector_store %arg5[%c0_34, %c0_35], %69 {strides = array<i32>} : memref<8x128xf32, #tpu.memory_space<vmem>>, vector<8x128xf32>,
      %cst_36 = arith.constant 0.000000e+00 : f32
      %71 = vector.broadcast %cst_36 : f32 to vector<8x128xf32>
      %c0_37 = arith.constant 0 : index
      %c0_38 = arith.constant 0 : index
      %72 = vector.load %arg6[%c0_37, %c0_38] : memref<8x128xf32, #tpu.memory_space<vmem>>, vector<8x128xf32>
      tpu.vector_store %arg6[%c0_37, %c0_38], %71 {strides = array<i32>} : memref<8x128xf32, #tpu.memory_space<vmem>>, vector<8x128xf32>,
    } else {
    }
    %c0_4 = arith.constant 0 : index
    %c0_5 = arith.constant 0 : index
    %9 = vector.load %arg5[%c0_4, %c0_5] : memref<8x128xf32, #tpu.memory_space<vmem>>, vector<8x128xf32>
    %10 = arith.addf %9, %2 : vector<8x128xf32>
    %c0_6 = arith.constant 0 : index
    %c0_7 = arith.constant 0 : index
    %11 = vector.load %arg5[%c0_6, %c0_7] : memref<8x128xf32, #tpu.memory_space<vmem>>, vector<8x128xf32>
    tpu.vector_store %arg5[%c0_6, %c0_7], %10 {strides = array<i32>} : memref<8x128xf32, #tpu.memory_space<vmem>>, vector<8x128xf32>,
    %cst_8 = arith.constant -1.000000e+30 : f32
    %12 = vector.broadcast %cst_8 : f32 to vector<8x128xf32>
    %13 = arith.select %5, %2, %12 : vector<8x128xi1>, vector<8x128xf32>
    %cst_9 = arith.constant 0.000000e+00 : f32
    %14 = vector.broadcast %cst_9 : f32 to vector<8x128xf32>
    %cst_10 = arith.constant dense<0xFF800000> : vector<8xf32>
    %15 = vector.multi_reduction <maximumf>, %13, %cst_10 [1] : vector<8x128xf32> to vector<8xf32>
    %16 = vector.shape_cast %15 : vector<8xf32> to vector<8x1xf32>
    %17 = vector.broadcast %16 : vector<8x1xf32> to vector<8x128xf32>
    %18 = arith.cmpf oeq, %13, %17 : vector<8x128xf32>
    %cst_11 = arith.constant 1.000000e+00 : f32
    %19 = vector.broadcast %cst_11 : f32 to vector<8x128xf32>
    %20 = arith.select %18, %19, %14 : vector<8x128xi1>, vector<8x128xf32>
    %cst_12 = arith.constant -1.000000e+30 : f32
    %21 = vector.broadcast %cst_12 : f32 to vector<8x128xf32>
    %22 = arith.select %18, %21, %13 : vector<8x128xi1>, vector<8x128xf32>
    %cst_13 = arith.constant dense<0xFF800000> : vector<8xf32>
    %23 = vector.multi_reduction <maximumf>, %22, %cst_13 [1] : vector<8x128xf32> to vector<8xf32>
    %24 = vector.shape_cast %23 : vector<8xf32> to vector<8x1xf32>
    %25 = vector.broadcast %24 : vector<8x1xf32> to vector<8x128xf32>
    %26 = arith.cmpf oeq, %22, %25 : vector<8x128xf32>
    %cst_14 = arith.constant 1.000000e+00 : f32
    %27 = vector.broadcast %cst_14 : f32 to vector<8x128xf32>
    %28 = arith.select %26, %27, %20 : vector<8x128xi1>, vector<8x128xf32>
    %cst_15 = arith.constant -1.000000e+30 : f32
    %29 = vector.broadcast %cst_15 : f32 to vector<8x128xf32>
    %30 = arith.select %26, %29, %22 : vector<8x128xi1>, vector<8x128xf32>
    %cst_16 = arith.constant dense<0xFF800000> : vector<8xf32>
    %31 = vector.multi_reduction <maximumf>, %30, %cst_16 [1] : vector<8x128xf32> to vector<8xf32>
    %32 = vector.shape_cast %31 : vector<8xf32> to vector<8x1xf32>
    %33 = vector.broadcast %32 : vector<8x1xf32> to vector<8x128xf32>
    %34 = arith.cmpf oeq, %30, %33 : vector<8x128xf32>
    %cst_17 = arith.constant 1.000000e+00 : f32
    %35 = vector.broadcast %cst_17 : f32 to vector<8x128xf32>
    %36 = arith.select %34, %35, %28 : vector<8x128xi1>, vector<8x128xf32>
    %cst_18 = arith.constant -1.000000e+30 : f32
    %37 = vector.broadcast %cst_18 : f32 to vector<8x128xf32>
    %38 = arith.select %34, %37, %30 : vector<8x128xi1>, vector<8x128xf32>
    %cst_19 = arith.constant dense<0xFF800000> : vector<8xf32>
    %39 = vector.multi_reduction <maximumf>, %38, %cst_19 [1] : vector<8x128xf32> to vector<8xf32>
    %40 = vector.shape_cast %39 : vector<8xf32> to vector<8x1xf32>
    %41 = vector.broadcast %40 : vector<8x1xf32> to vector<8x128xf32>
    %42 = arith.cmpf oeq, %38, %41 : vector<8x128xf32>
    %cst_20 = arith.constant 1.000000e+00 : f32
    %43 = vector.broadcast %cst_20 : f32 to vector<8x128xf32>
    %44 = arith.select %42, %43, %36 : vector<8x128xi1>, vector<8x128xf32>
    %cst_21 = arith.constant -1.000000e+30 : f32
    %45 = vector.broadcast %cst_21 : f32 to vector<8x128xf32>
    %46 = arith.select %42, %45, %38 : vector<8x128xi1>, vector<8x128xf32>
    %cst_22 = arith.constant dense<0xFF800000> : vector<8xf32>
    %47 = vector.multi_reduction <maximumf>, %46, %cst_22 [1] : vector<8x128xf32> to vector<8xf32>
    %48 = vector.shape_cast %47 : vector<8xf32> to vector<8x1xf32>
    %49 = vector.broadcast %48 : vector<8x1xf32> to vector<8x128xf32>
    %50 = arith.cmpf oeq, %46, %49 : vector<8x128xf32>
    %cst_23 = arith.constant 1.000000e+00 : f32
    %51 = vector.broadcast %cst_23 : f32 to vector<8x128xf32>
    %52 = arith.select %50, %51, %44 : vector<8x128xi1>, vector<8x128xf32>
    %cst_24 = arith.constant -1.000000e+30 : f32
    %53 = vector.broadcast %cst_24 : f32 to vector<8x128xf32>
    %54 = arith.select %50, %53, %46 : vector<8x128xi1>, vector<8x128xf32>
    %cst_25 = arith.constant dense<0xFF800000> : vector<8xf32>
    %55 = vector.multi_reduction <maximumf>, %54, %cst_25 [1] : vector<8x128xf32> to vector<8xf32>
    %56 = vector.shape_cast %55 : vector<8xf32> to vector<8x1xf32>
    %57 = vector.broadcast %56 : vector<8x1xf32> to vector<8x128xf32>
    %58 = arith.cmpf oeq, %54, %57 : vector<8x128xf32>
    %cst_26 = arith.constant 1.000000e+00 : f32
    %59 = vector.broadcast %cst_26 : f32 to vector<8x128xf32>
    %60 = arith.select %58, %59, %52 : vector<8x128xi1>, vector<8x128xf32>
    %c0_27 = arith.constant 0 : index
    %c0_28 = arith.constant 0 : index
    %61 = vector.load %arg6[%c0_27, %c0_28] : memref<8x128xf32, #tpu.memory_space<vmem>>, vector<8x128xf32>
    %cst_29 = arith.constant 0.166666672 : f32
    %62 = vector.broadcast %cst_29 : f32 to vector<8x128xf32>
    %63 = arith.mulf %60, %62 : vector<8x128xf32>
    %64 = arith.addf %61, %63 : vector<8x128xf32>
    %c0_30 = arith.constant 0 : index
    %c0_31 = arith.constant 0 : index
    %65 = vector.load %arg6[%c0_30, %c0_31] : memref<8x128xf32, #tpu.memory_space<vmem>>, vector<8x128xf32>
    tpu.vector_store %arg6[%c0_30, %c0_31], %64 {strides = array<i32>} : memref<8x128xf32, #tpu.memory_space<vmem>>, vector<8x128xf32>,
    %c3_i32 = arith.constant 3 : i32
    %66 = arith.cmpi eq, %arg0, %c3_i32 : i32
    %67 = arith.extui %66 : i1 to i32
    %c0_i32_32 = arith.constant 0 : i32
    %68 = arith.cmpi ne, %67, %c0_i32_32 : i32
    scf.if %68 {
      %c0_33 = arith.constant 0 : index
      %c0_34 = arith.constant 0 : index
      %69 = vector.load %arg1[%c0_33, %c0_34] : memref<8x1xi32, #tpu.memory_space<vmem>>, vector<8x1xi32>
      %70 = vector.broadcast %69 : vector<8x1xi32> to vector<8x128xi32>
      %71 = arith.cmpi eq, %3, %70 : vector<8x128xi32>
      %c0_35 = arith.constant 0 : index
      %c0_36 = arith.constant 0 : index
      %72 = vector.load %arg5[%c0_35, %c0_36] : memref<8x128xf32, #tpu.memory_space<vmem>>, vector<8x128xf32>
      %cst_37 = arith.constant 2.000000e+01 : f32
      %73 = vector.broadcast %cst_37 : f32 to vector<8x128xf32>
      %74 = arith.mulf %72, %73 : vector<8x128xf32>
      %cst_38 = arith.constant -1.000000e+30 : f32
      %75 = vector.broadcast %cst_38 : f32 to vector<8x128xf32>
      %76 = arith.select %5, %74, %75 : vector<8x128xi1>, vector<8x128xf32>
      %cst_39 = arith.constant dense<0xFF800000> : vector<8xf32>
      %77 = vector.multi_reduction <maximumf>, %76, %cst_39 [1] : vector<8x128xf32> to vector<8xf32>
      %78 = vector.shape_cast %77 : vector<8xf32> to vector<8x1xf32>
      %79 = vector.broadcast %78 : vector<8x1xf32> to vector<8x128xf32>
      %80 = arith.subf %76, %79 : vector<8x128xf32>
      %81 = math.exp %80 : vector<8x128xf32>
      %cst_40 = arith.constant dense<0.000000e+00> : vector<8xf32>
      %82 = vector.multi_reduction <add>, %81, %cst_40 [1] : vector<8x128xf32> to vector<8xf32>
      %83 = vector.shape_cast %82 : vector<8xf32> to vector<8x1xf32>
      %84 = math.log %83 : vector<8x1xf32>
      %85 = vector.broadcast %84 : vector<8x1xf32> to vector<8x128xf32>
      %86 = arith.subf %80, %85 : vector<8x128xf32>
      %c0_41 = arith.constant 0 : index
      %c0_42 = arith.constant 0 : index
      %87 = vector.load %arg6[%c0_41, %c0_42] : memref<8x128xf32, #tpu.memory_space<vmem>>, vector<8x128xf32>
      %cst_43 = arith.constant 4.000000e+00 : f32
      %88 = vector.broadcast %cst_43 : f32 to vector<8x128xf32>
      %89 = arith.select %71, %88, %87 : vector<8x128xi1>, vector<8x128xf32>
      %cst_44 = arith.constant 0.000000e+00 : f32
      %90 = vector.broadcast %cst_44 : f32 to vector<8x128xf32>
      %91 = arith.select %5, %89, %90 : vector<8x128xi1>, vector<8x128xf32>
      %cst_45 = arith.constant 0.000000e+00 : f32
      %92 = vector.broadcast %cst_45 : f32 to vector<8x128xf32>
      %93 = arith.subf %92, %91 : vector<8x128xf32>
      %94 = arith.mulf %93, %86 : vector<8x128xf32>
      %cst_46 = arith.constant dense<0.000000e+00> : vector<8xf32>
      %95 = vector.multi_reduction <add>, %94, %cst_46 [1] : vector<8x128xf32> to vector<8xf32>
      %96 = vector.shape_cast %95 : vector<8xf32> to vector<8x1xf32>
      %97 = tpu.iota {dimensions = array<i32: 0>} : vector<8x1xi32>
      %c8_i32 = arith.constant 8 : i32
      %98 = vector.broadcast %c8_i32 : i32 to vector<8x1xi32>
      %99 = arith.cmpi slt, %97, %98 : vector<8x1xi32>
      %cst_47 = arith.constant 0.000000e+00 : f32
      %100 = vector.broadcast %cst_47 : f32 to vector<8x1xf32>
      %101 = arith.select %99, %96, %100 : vector<8x1xi1>, vector<8x1xf32>
      %cst_48 = arith.constant dense<0.000000e+00> : vector<1xf32>
      %102 = vector.multi_reduction <add>, %101, %cst_48 [0] : vector<8x1xf32> to vector<1xf32>
      %103 = vector.shape_cast %102 : vector<1xf32> to vector<1x1xf32>
      %cst_49 = arith.constant 3.125000e-02 : f32
      %104 = vector.broadcast %cst_49 : f32 to vector<1x1xf32>
      %105 = arith.mulf %103, %104 : vector<1x1xf32>
      %c0_50 = arith.constant 0 : index
      %c0_51 = arith.constant 0 : index
      %106 = vector.load %arg4[%c0_50, %c0_51] : memref<1x1xf32, #tpu.memory_space<vmem>>, vector<1x1xf32>
      tpu.vector_store %arg4[%c0_50, %c0_51], %105 {strides = array<i32>} : memref<1x1xf32, #tpu.memory_space<vmem>>, vector<1x1xf32>,
    } else {
    }
    return
  }
  func.func @transform_0(%arg0: i32) -> (i32, i32) {
    %c0_i32 = arith.constant 0 : i32
    %c0_i32_0 = arith.constant 0 : i32
    %c0_i32_1 = arith.constant 0 : i32
    return %c0_i32, %c0_i32_0 : i32, i32
  }
  func.func @transform_1(%arg0: i32) -> (i32, i32) {
    %c0_i32 = arith.constant 0 : i32
    %c0_i32_0 = arith.constant 0 : i32
    return %c0_i32, %arg0 : i32, i32
  }
  func.func @transform_2(%arg0: i32) -> (i32, i32) {
    %c0_i32 = arith.constant 0 : i32
    %c0_i32_0 = arith.constant 0 : i32
    return %c0_i32, %arg0 : i32, i32
  }
  func.func @transform_3(%arg0: i32) -> (i32, i32) {
    %c0_i32 = arith.constant 0 : i32
    %c0_i32_0 = arith.constant 0 : i32
    %c0_i32_1 = arith.constant 0 : i32
    return %c0_i32, %c0_i32_0 : i32, i32
  }
}

</mosaic_0001>

<llo_original>
// kernel: tpu_custom_call.1
$region0: #{tpu_custom_call.1}
  #allocation0 [shape = 'u32[]', space=smem, size = 0x4, offset = 0x4, fixed_abs, tag = 'smem constant byte address 0x4 - core index']
  #allocation1 [shape = 'u32[144,128]{1,0:T(1,128)}', space=vmem, size = 0x12000, scoped, tag = 'internal scratch']
  #allocation2 [shape = 'f32[8,128]{1,0:T(8,128)}', space=vmem, size = 0x1000, scoped, tag = 'scratch operand']
  #allocation3 [shape = 'f32[8,128]{1,0:T(8,128)}', space=vmem, size = 0x1000, scoped, tag = 'scratch operand']
  %s0 = inlined_call_operand.vmem [shape: s32[8,1], index: 0, kind: input, shape index: {}]
  %s1 = inlined_call_operand.hbm [shape: f32[8,512], index: 1, kind: input, shape index: {}]
  %s2 = inlined_call_operand.hbm [shape: f32[128,512], index: 2, kind: input, shape index: {}]
  %s3 = inlined_call_operand.hbm [shape: f32[1,1], index: 3, kind: output, shape index: {}]
  %s4 = sld [smem:[#allocation0]]
  $region61: #{tpu_custom_call.1} parent=0
    _
  %s6 = ssub.s32 1, %s4
  %s7 = scalar_select 0, %s6, %s4
  $region1: #{tpu_custom_call.1} parent=0
    #allocation4 [shape = 'u8[8192]{0}', space=vmem, size = 0x2000, scoped, tag = 'input window, operand 1']
    #allocation5 [shape = 's32[2]{0}', space=sflag, size = 0x8, scoped, tag = 'scoped memory for tpu_custom_call.1']
    #allocation6 [shape = 's32[2]{0}', space=sflag, size = 0x8, scoped, tag = 'scoped memory for tpu_custom_call.1']
    #allocation7 [shape = 'u8[131072]{0}', space=vmem, size = 0x20000, scoped, tag = 'input window, operand 2']
    #allocation8 [shape = 's32[2]{0}', space=sflag, size = 0x8, scoped, tag = 'scoped memory for tpu_custom_call.1']
    #allocation9 [shape = 'u8[512]{0}', space=vmem, size = 0x400, scoped, tag = 'output window, operand 0, single buffered']
    %8 = vsyncpa [#allocation5], 0
    %s9 = scalar_lea.sflag [#allocation5], 1
    %10 = vsyncpa %s9, 0
    %11 = vsyncpa [#allocation8], 0
    %s12 = scalar_lea.sflag [#allocation8], 1
    %13 = vsyncpa %s12, 0
    %14 = vsyncpa [#allocation6], 0
    loop: start=0, step=1, limit=6
    $region2: #{tpu_custom_call.1} parent=1 // loop_pre_header
      _
    $region3: #{tpu_custom_call.1} parent=1 // loop_header
      %s16 = sphi 0, %s20
      %p17 = scmp.ge.s32.totalorder %s16, 6
      %s24 = sphi 0, %s24
      %s26 = sphi 0, %s24
      %s27 = sphi 0, %s26
      %s41 = sphi 0, %s27
      %s47 = sphi 0, %s49
      %s50 = sphi 0, %s47
      %s51 = sphi 0, %s50
      %s67 = sphi 0, %s51
      %s73 = sphi 0, %s75
      %s76 = sphi 0, %s73
      %s77 = sphi 0, %s76
      %s93 = sphi 0, %s77
      %s97 = sphi 0, %s97
      %s99 = sphi 0, %s97
      %s100 = sphi 0, %s99
      %s114 = sphi 0, %s100
    $region4: #{tpu_custom_call.1} parent=1 // loop_header_branch
      %19 = sbr.rel (%p17) target = $region8
    $region5: #{tpu_custom_call.1} parent=1 // loop_body
      %s21 = ssub.s32 %s16, 1
      %s22 = ssub.s32 %s16, 2
      %s23 = sadd.s32 %s16, 1
      %s25 = sadd.s32 %s24, 1
      %p28 = scmp.eq.s32.totalorder %s16, 3
      %p29 = scmp.ne.s32.totalorder %s24, %s26
      %p30 = scmp.eq.s32.totalorder %s16, 0
      %p31 = por %p29, %p30
      %p32 = scmp.ne.s32.totalorder %s24, %s26
      %p33 = scmp.eq.s32.totalorder %s21, 3
      %p34 = por %p32, %p33
      %p35 = scmp.ne.s32.totalorder %s26, %s27
      %p36 = scmp.eq.s32.totalorder %s21, 0
      %p37 = por %p35, %p36
      %p38 = scmp.ne.s32.totalorder %s26, %s27
      %p39 = scmp.eq.s32.totalorder %s22, 3
      %p40 = por %p38, %p39
      %p42 = scmp.ne.s32.totalorder %s27, %s41
      %p43 = scmp.eq.s32.totalorder %s22, 0
      %p44 = por %p42, %p43
      %s45 = ssub.s32 %s16, %s23
      %p46 = scmp.eq.s32.totalorder %s45, 0
      %s48 = sadd.s32 %s47, 1
      %s49 = scalar_select %p46, %s47, %s48
      %p52 = pneg %p46
      %p53 = scmp.eq.s32.totalorder %s16, 3
      %p54 = por %p52, %p53
      %p55 = scmp.ne.s32.totalorder %s47, %s50
      %p56 = scmp.eq.s32.totalorder %s16, 0
      %p57 = por %p55, %p56
      %p58 = scmp.ne.s32.totalorder %s47, %s50
      %p59 = scmp.eq.s32.totalorder %s21, 3
      %p60 = por %p58, %p59
      %p61 = scmp.ne.s32.totalorder %s50, %s51
      %p62 = scmp.eq.s32.totalorder %s21, 0
      %p63 = por %p61, %p62
      %p64 = scmp.ne.s32.totalorder %s50, %s51
      %p65 = scmp.eq.s32.totalorder %s22, 3
      %p66 = por %p64, %p65
      %p68 = scmp.ne.s32.totalorder %s51, %s67
      %p69 = scmp.eq.s32.totalorder %s22, 0
      %p70 = por %p68, %p69
      %s71 = ssub.s32 %s16, %s23
      %p72 = scmp.eq.s32.totalorder %s71, 0
      %s74 = sadd.s32 %s73, 1
      %s75 = scalar_select %p72, %s73, %s74
      %p78 = pneg %p72
      %p79 = scmp.eq.s32.totalorder %s16, 3
      %p80 = por %p78, %p79
      %p81 = scmp.ne.s32.totalorder %s73, %s76
      %p82 = scmp.eq.s32.totalorder %s16, 0
      %p83 = por %p81, %p82
      %p84 = scmp.ne.s32.totalorder %s73, %s76
      %p85 = scmp.eq.s32.totalorder %s21, 3
      %p86 = por %p84, %p85
      %p87 = scmp.ne.s32.totalorder %s76, %s77
      %p88 = scmp.eq.s32.totalorder %s21, 0
      %p89 = por %p87, %p88
      %p90 = scmp.ne.s32.totalorder %s76, %s77
      %p91 = scmp.eq.s32.totalorder %s22, 3
      %p92 = por %p90, %p91
      %p94 = scmp.ne.s32.totalorder %s77, %s93
      %p95 = scmp.eq.s32.totalorder %s22, 0
      %p96 = por %p94, %p95
      %s98 = sadd.s32 %s97, 1
      %p101 = scmp.eq.s32.totalorder %s16, 3
      %p102 = scmp.ne.s32.totalorder %s97, %s99
      %p103 = scmp.eq.s32.totalorder %s16, 0
      %p104 = por %p102, %p103
      %p105 = scmp.ne.s32.totalorder %s97, %s99
      %p106 = scmp.eq.s32.totalorder %s21, 3
      %p107 = por %p105, %p106
      %p108 = scmp.ne.s32.totalorder %s99, %s100
      %p109 = scmp.eq.s32.totalorder %s21, 0
      %p110 = por %p108, %p109
      %p111 = scmp.ne.s32.totalorder %s99, %s100
      %p112 = scmp.eq.s32.totalorder %s22, 3
      %p113 = por %p111, %p112
      %p115 = scmp.ne.s32.totalorder %s100, %s114
      %p116 = scmp.eq.s32.totalorder %s22, 0
      %p117 = por %p115, %p116
      %p118 = scmp.le.s32.totalorder 1, %s16
      %p119 = scmp.lt.s32.totalorder %s16, 5
      %p120 = pnand %p118, %p119
      %p121 = pneg %p120
      // Predicated region
      $region9: #{tpu_custom_call.1} parent=5 // pred_check
        _
      $region10: #{tpu_custom_call.1} parent=5 // pred_check_branch
        %123 = sbr.rel (%p120) target = $region12
      $region11: #{tpu_custom_call.1} parent=5 // pred_region
        %s124 = ssub.s32 %s16, 1
        // Predicated region
        $region13: #{tpu_custom_call.1} parent=11 // pred_check
          %p125 = pneg %p37
        $region14: #{tpu_custom_call.1} parent=11 // pred_check_branch
          %127 = sbr.rel (%p125) target = $region16
        $region15: #{tpu_custom_call.1} parent=11 // pred_region
          _
        $region16: #{tpu_custom_call.1} parent=11 // pred_fallthru
          _
      $region12: #{tpu_custom_call.1} parent=5 // pred_fallthru
        _
      %p128 = scmp.lt.s32.totalorder %s16, 4
      // Predicated region
      $region17: #{tpu_custom_call.1} parent=5 // pred_check
        %p129 = pneg %p128
      $region18: #{tpu_custom_call.1} parent=5 // pred_check_branch
        %131 = sbr.rel (%p129) target = $region20
      $region19: #{tpu_custom_call.1} parent=5 // pred_region
        // Predicated region
        $region21: #{tpu_custom_call.1} parent=19 // pred_check
          %p132 = pneg %p57
        $region22: #{tpu_custom_call.1} parent=19 // pred_check_branch
          %134 = sbr.rel (%p132) target = $region24
        $region23: #{tpu_custom_call.1} parent=19 // pred_region
          %s135 = sand.u32 %s47, 1
          %s136 = scalar_lea.sflag [#allocation5], %s135
          %s137 = sand.u32 %s47, 1
          %s138 = smul.addr %s137, 8
          %s139 = scalar_lea.vmem [#allocation4], %s138
          %s141 = ssub.s32 128, 128
          %142 = vsyncadd %s136, %s141
          %s143 = smul.addr %s16, 128
          %s144 = scalar_lea.hbm %s1, %s143
          %s146 = sshll.u32 %s139, 4
          %s147 = int_to_ptr.vmem [resolvable:$true] %s146
          %149 = dma.hbm_to_vmem [thread:$0]  %s144, 128, %s147, %s136
        $region24: #{tpu_custom_call.1} parent=19 // pred_fallthru
          _
        // Predicated region
        $region25: #{tpu_custom_call.1} parent=19 // pred_check
          %p150 = pneg %p83
        $region26: #{tpu_custom_call.1} parent=19 // pred_check_branch
          %152 = sbr.rel (%p150) target = $region28
        $region27: #{tpu_custom_call.1} parent=19 // pred_region
          %s153 = sand.u32 %s73, 1
          %s154 = scalar_lea.sflag [#allocation8], %s153
          %s155 = sand.u32 %s73, 1
          %s156 = smul.addr %s155, 128
          %s157 = scalar_lea.vmem [#allocation7], %s156
          %s159 = ssub.s32 2048, 2048
          %160 = vsyncadd %s154, %s159
          %s161 = smul.addr %s16, 128
          %s162 = scalar_lea.hbm %s2, %s161
          %s163 = sshll.u32 %s157, 4
          %s164 = int_to_ptr.vmem [resolvable:$true] %s163
          %169 = dma.hbm_to_vmem [thread:$0]  %s162, 2048, %s164, %s154, 512, 128, 8
        $region28: #{tpu_custom_call.1} parent=19 // pred_fallthru
          _
      $region20: #{tpu_custom_call.1} parent=5 // pred_fallthru
        _
      %p170 = scmp.le.s32.totalorder 1, %s16
      %p171 = scmp.lt.s32.totalorder %s16, 5
      %p172 = pnand %p170, %p171
      %p173 = pneg %p172
      // Predicated region
      $region29: #{tpu_custom_call.1} parent=5 // pred_check
        _
      $region30: #{tpu_custom_call.1} parent=5 // pred_check_branch
        %175 = sbr.rel (%p172) target = $region32
      $region31: #{tpu_custom_call.1} parent=5 // pred_region
        %s176 = ssub.s32 %s16, 1
        %s177 = sand.u32 %s50, 1
        %s178 = scalar_lea.sflag [#allocation5], %s177
        %s179 = sand.u32 %s50, 1
        %s180 = smul.addr %s179, 8
        %s181 = scalar_lea.vmem [#allocation4], %s180
        // Predicated region
        $region33: #{tpu_custom_call.1} parent=31 // pred_check
          %p182 = pneg %p63
        $region34: #{tpu_custom_call.1} parent=31 // pred_check_branch
          %184 = sbr.rel (%p182) target = $region36
        $region35: #{tpu_custom_call.1} parent=31 // pred_region
          %185 = dma.done %s178, 128
        $region36: #{tpu_custom_call.1} parent=31 // pred_fallthru
          _
        %s186 = sand.u32 %s76, 1
        %s187 = scalar_lea.sflag [#allocation8], %s186
        %s188 = sand.u32 %s76, 1
        %s189 = smul.addr %s188, 128
        %s190 = scalar_lea.vmem [#allocation7], %s189
        // Predicated region
        $region37: #{tpu_custom_call.1} parent=31 // pred_check
          %p191 = pneg %p89
        $region38: #{tpu_custom_call.1} parent=31 // pred_check_branch
          %193 = sbr.rel (%p191) target = $region40
        $region39: #{tpu_custom_call.1} parent=31 // pred_region
          %194 = dma.done %s187, 2048
        $region40: #{tpu_custom_call.1} parent=31 // pred_fallthru
          _
        %p195 = pneg %p37
        %p196 = pneg %p34
        %s197 = sand.u32 %s50, 1
        %s198 = scalar_lea.sflag [#allocation5], %s197
        %s199 = sand.u32 %s50, 1
        %s200 = smul.addr %s199, 8
        %s201 = scalar_lea.vmem [#allocation4], %s200
        %p202 = pneg %p63
        %p203 = pneg %p60
        %s204 = sand.u32 %s76, 1
        %s205 = scalar_lea.sflag [#allocation8], %s204
        %s206 = sand.u32 %s76, 1
        %s207 = smul.addr %s206, 128
        %s208 = scalar_lea.vmem [#allocation7], %s207
        %p209 = pneg %p89
        %p210 = pneg %p86
        %p211 = pneg %p110
        %p212 = pneg %p107
        %v213 = vld [vmem:[%s181] sm:$0xff]
        %v214 = vld [vmem:[%s190] sm:$0xff]
        %v215 = vld [vmem:[%s190 + $0x8] sm:$0xff]
        %v216 = vld [vmem:[%s190 + $0x10] sm:$0xff]
        %v217 = vld [vmem:[%s190 + $0x18] sm:$0xff]
        %v218 = vld [vmem:[%s190 + $0x20] sm:$0xff]
        %v219 = vld [vmem:[%s190 + $0x28] sm:$0xff]
        %v220 = vld [vmem:[%s190 + $0x30] sm:$0xff]
        %v221 = vld [vmem:[%s190 + $0x38] sm:$0xff]
        %v222 = vld [vmem:[%s190 + $0x40] sm:$0xff]
        %v223 = vld [vmem:[%s190 + $0x48] sm:$0xff]
        %v224 = vld [vmem:[%s190 + $0x50] sm:$0xff]
        %v225 = vld [vmem:[%s190 + $0x58] sm:$0xff]
        %v226 = vld [vmem:[%s190 + $0x60] sm:$0xff]
        %v227 = vld [vmem:[%s190 + $0x68] sm:$0xff]
        %v228 = vld [vmem:[%s190 + $0x70] sm:$0xff]
        %v229 = vld [vmem:[%s190 + $0x78] sm:$0xff]
        %230 = vmatprep.subr.mxu0 0.0
        %231 = vmatpush1.xpose.msra.mxu0 %v214
        %232 = vmatprep.subr.mxu0 0.0
        %233 = vmatpush1.xpose.msra.mxu0 %v215
        %234 = vmatprep.subr.mxu0 0.0
        %235 = vmatpush1.xpose.msra.mxu0 %v216
        %236 = vmatprep.subr.mxu0 0.0
        %237 = vmatpush1.xpose.msra.mxu0 %v217
        %238 = vmatprep.subr.mxu0 0.0
        %239 = vmatpush1.xpose.msra.mxu0 %v218
        %240 = vmatprep.subr.mxu0 0.0
        %241 = vmatpush1.xpose.msra.mxu0 %v219
        %242 = vmatprep.subr.mxu0 0.0
        %243 = vmatpush1.xpose.msra.mxu0 %v220
        %244 = vmatprep.subr.mxu0 0.0
        %245 = vmatpush1.xpose.msra.mxu0 %v221
        %246 = vmatprep.subr.mxu0 0.0
        %247 = vmatpush1.xpose.msra.mxu0 %v222
        %248 = vmatprep.subr.mxu0 0.0
        %249 = vmatpush1.xpose.msra.mxu0 %v223
        %250 = vmatprep.subr.mxu0 0.0
        %251 = vmatpush1.xpose.msra.mxu0 %v224
        %252 = vmatprep.subr.mxu0 0.0
        %253 = vmatpush1.xpose.msra.mxu0 %v225
        %254 = vmatprep.subr.mxu0 0.0
        %255 = vmatpush1.xpose.msra.mxu0 %v226
        %256 = vmatprep.subr.mxu0 0.0
        %257 = vmatpush1.xpose.msra.mxu0 %v227
        %258 = vmatprep.subr.mxu0 0.0
        %259 = vmatpush1.xpose.msra.mxu0 %v228
        %260 = vmatprep.subr.mxu0 0.0
        %261 = vmatpush1.xpose.msra.mxu0 %v229
        %262 = vmatprep.subr.mxu0 0.0
        %263 = vmatpush1.xpose.msra.mxu0 0.0
        %264 = vmatprep.subr.mxu0 0.0
        %265 = vmatpush1.xpose.msra.mxu0 0.0
        %266 = vmatprep.subr.mxu0 0.0
        %267 = vmatpush1.xpose.msra.mxu0 0.0
        %268 = vmatprep.subr.mxu0 0.0
        %269 = vmatpush1.xpose.msra.mxu0 0.0
        %270 = vmatprep.subr.mxu0 0.0
        %271 = vmatpush1.xpose.msra.mxu0 0.0
        %272 = vmatprep.subr.mxu0 0.0
        %273 = vmatpush1.xpose.msra.mxu0 0.0
        %274 = vmatprep.subr.mxu0 0.0
        %275 = vmatpush1.xpose.msra.mxu0 0.0
        %276 = vmatprep.subr.mxu0 0.0
        %277 = vmatpush1.xpose.msra.mxu0 0.0
        %278 = vmatprep.subr.mxu0 0.0
        %279 = vmatpush1.xpose.msra.mxu0 0.0
        %280 = vmatprep.subr.mxu0 0.0
        %281 = vmatpush1.xpose.msra.mxu0 0.0
        %282 = vmatprep.subr.mxu0 0.0
        %283 = vmatpush1.xpose.msra.mxu0 0.0
        %284 = vmatprep.subr.mxu0 0.0
        %285 = vmatpush1.xpose.msra.mxu0 0.0
        %286 = vmatprep.subr.mxu0 0.0
        %287 = vmatpush1.xpose.msra.mxu0 0.0
        %288 = vmatprep.subr.mxu0 0.0
        %289 = vmatpush1.xpose.msra.mxu0 0.0
        %290 = vmatprep.subr.mxu0 0.0
        %291 = vmatpush1.xpose.msra.mxu0 0.0
        %292 = vmatprep.subr.mxu0 0.0
        %293 = vmatpush1.xpose.msra.mxu0 0.0
        %294 = vmatprep.mubr.f32.mxu0 0.0
        %295 = vmatmul.mubr.f32.gmra.mrb[0].mxu0 %v213
        %v296 = vpop.f32.mrb[0].mxu0
        %v297 = vadd.f32 0.0, %v296
        %v298 = vpop.f32.mrb[0].mxu0
        %299 = vdwg.mxu0
        %v300 = vlaneseq
        %v301 = vand.u32 %v300, 127
        %vm302 = vcmp.lt.s32.totalorder %v301, 16
        %p303 = scmp.eq.s32.totalorder %s21, 0
        // Predicated region
        $region41: #{tpu_custom_call.1} parent=31 // pred_check
          %p304 = pneg %p303
        $region42: #{tpu_custom_call.1} parent=31 // pred_check_branch
          %306 = sbr.rel (%p304) target = $region44
        $region43: #{tpu_custom_call.1} parent=31 // pred_region
          %307 = vst [vmem:[#allocation2] sm:$0xff] 0.0
          %308 = vst [vmem:[#allocation3] sm:$0xff] 0.0
        $region44: #{tpu_custom_call.1} parent=31 // pred_fallthru
          _
        %v309 = vld [vmem:[#allocation2] sm:$0xff]
        %v310 = vadd.f32 %v309, %v297
        %311 = vst [vmem:[#allocation2] sm:$0xff] %v310
        %v312 = vsel %vm302, %v297, -1e+30
        %313 = vmax.xlane.f32.xlu0 %v312
        %v314 = vpop.xlane.xlu0 %313
        %vm315 = vcmp.eq.f32.partialorder %v312, %v314
        %v316 = vsel %vm315, 1.0, 0.0
        %v317 = vsel %vm315, -1e+30, %v312
        %318 = vmax.xlane.f32.xlu0 %v317
        %v319 = vpop.xlane.xlu0 %318
        %vm320 = vcmp.eq.f32.partialorder %v317, %v319
        %v321 = vsel %vm320, 1.0, %v316
        %v322 = vsel %vm320, -1e+30, %v317
        %323 = vmax.xlane.f32.xlu0 %v322
        %v324 = vpop.xlane.xlu0 %323
        %vm325 = vcmp.eq.f32.partialorder %v322, %v324
        %v326 = vsel %vm325, 1.0, %v321
        %v327 = vsel %vm325, -1e+30, %v322
        %328 = vmax.xlane.f32.xlu0 %v327
        %v329 = vpop.xlane.xlu0 %328
        %vm330 = vcmp.eq.f32.partialorder %v327, %v329
        %v331 = vsel %vm330, 1.0, %v326
        %v332 = vsel %vm330, -1e+30, %v327
        %333 = vmax.xlane.f32.xlu0 %v332
        %v334 = vpop.xlane.xlu0 %333
        %vm335 = vcmp.eq.f32.partialorder %v332, %v334
        %v336 = vsel %vm335, 1.0, %v331
        %v337 = vsel %vm335, -1e+30, %v332
        %338 = vmax.xlane.f32.xlu0 %v337
        %v339 = vpop.xlane.xlu0 %338
        %vm340 = vcmp.eq.f32.partialorder %v337, %v339
        %v341 = vsel %vm340, 1.0, %v336
        %v342 = vld [vmem:[#allocation3] sm:$0xff]
        %v343 = vmul.f32 %v341, 0.16666667
        %v344 = vadd.f32 %v342, %v343
        %345 = vst [vmem:[#allocation3] sm:$0xff] %v344
        %p346 = scmp.eq.s32.totalorder %s21, 3
        // Predicated region
        $region45: #{tpu_custom_call.1} parent=31 // pred_check
          %p347 = pneg %p346
        $region46: #{tpu_custom_call.1} parent=31 // pred_check_branch
          %349 = sbr.rel (%p347) target = $region48
        $region47: #{tpu_custom_call.1} parent=31 // pred_region
          %v350 = vld [vmem:[%s0] sm:$0xff]
          %351 = vset.pattern.permute.xlu0 0
          %352 = vperm.xlu0 %351, %v350
          %v353 = vpop.permute.xlu0 %352
          %vm354 = vcmp.eq.s32.totalorder %v301, %v353
          %v355 = vld [vmem:[#allocation2] sm:$0xff]
          %v356 = vmul.f32 %v355, 20.0
          %v357 = vsel %vm302, %v356, -1e+30
          %358 = vmax.xlane.f32.xlu0 %v357
          %v359 = vpop.xlane.xlu0 %358
          %v360 = vsub.f32 %v357, %v359
          %v361 = vmul.f32 %v360, 1.442695
          %v362 = vpow.pop %v361
          %363 = vadd.xlane.f32.xlu0 %v362
          %v364 = vpop.xlane.xlu0 %363
          %v365 = vlog2.pop %v364
          %v366 = vmul.f32 %v365, 0.6931472
          %v367 = vsub.f32 %v360, %v366
          %v368 = vld [vmem:[#allocation3] sm:$0xff]
          %v369 = vsel %vm354, 4.0, %v368
          %v370 = vsel %vm302, %v369, 0.0
          %v371 = vsub.f32 0.0, %v370
          %v372 = vmul.f32 %v371, %v367
          %373 = vadd.xlane.f32.xlu0 %v372
          %v374 = vpop.xlane.xlu0 %373
          %v375 = vlaneseq
          %v376 = vshrl.u32 %v375, 7
          %vm377 = vcmp.lt.s32.totalorder %v376, 8
          %v378 = vsel %vm377, %v374, 0.0
          %v379 = vrot.slane %v378, 4
          %v380 = vadd.f32 %v378, %v379
          %v381 = vrot.slane %v380, 2
          %v382 = vadd.f32 %v380, %v381
          %v383 = vrot.slane %v382, 1
          %v384 = vadd.f32 %v382, %v383
          %v385 = vmul.f32 %v384, 0.03125
          %vm386 = vcmask 0
          %387 = vst.msk [vmem:[#allocation9] sm:$0x1] %vm386, %v385
        $region48: #{tpu_custom_call.1} parent=31 // pred_fallthru
          _
        // Predicated region
        $region49: #{tpu_custom_call.1} parent=31 // pred_check
          %p388 = pneg %p107
        $region50: #{tpu_custom_call.1} parent=31 // pred_check_branch
          %390 = sbr.rel (%p388) target = $region52
        $region51: #{tpu_custom_call.1} parent=31 // pred_region
          %s392 = ssub.s32 16, 16
          %393 = vsyncadd [#allocation6], %s392
          %s395 = sshll.u32 [#allocation9], 4
          %s396 = int_to_ptr.vmem [resolvable:$true] %s395
          %398 = dma.vmem_to_hbm [thread:$0]  %s396, 16, %s3, [#allocation6]
        $region52: #{tpu_custom_call.1} parent=31 // pred_fallthru
          _
        // Predicated region
        $region53: #{tpu_custom_call.1} parent=31 // pred_check
          %p399 = pneg %p107
        $region54: #{tpu_custom_call.1} parent=31 // pred_check_branch
          %401 = sbr.rel (%p399) target = $region56
        $region55: #{tpu_custom_call.1} parent=31 // pred_region
          %402 = dma.done [#allocation6], 16
        $region56: #{tpu_custom_call.1} parent=31 // pred_fallthru
          _
      $region32: #{tpu_custom_call.1} parent=5 // pred_fallthru
        _
      %p403 = scmp.le.s32.totalorder 2, %s16
      // Predicated region
      $region57: #{tpu_custom_call.1} parent=5 // pred_check
        %p404 = pneg %p403
      $region58: #{tpu_custom_call.1} parent=5 // pred_check_branch
        %406 = sbr.rel (%p404) target = $region60
      $region59: #{tpu_custom_call.1} parent=5 // pred_region
        %s407 = ssub.s32 %s16, 2
      $region60: #{tpu_custom_call.1} parent=5 // pred_fallthru
        _
    $region6: #{tpu_custom_call.1} parent=1 // loop_footer
      %s20 = sadd.s32 1, %s16
    $region7: #{tpu_custom_call.1} parent=1 // loop_footer_branch
      %15 = sbr.rel target = $region3
    $region8: #{tpu_custom_call.1} parent=1 // loop_exit
      _
    %408 = vsyncpa [#allocation5], 1
    %s409 = scalar_lea.sflag [#allocation5], 1
    %410 = vsyncpa %s409, 1
    %411 = vsyncpa [#allocation8], 1
    %s412 = scalar_lea.sflag [#allocation8], 1
    %413 = vsyncpa %s412, 1
    %414 = vsyncpa [#allocation6], 1
    %s415 = scalar_lea.sflag [#allocation6], 1
    %416 = vsyncpa %s415, 1

</llo_original>
